<compile_context>
chip_gen: v5e
topology: v5e:2x2
jax: 0.10.0
libtpu: 0.0.40
codegen_flags: <defaults>
</compile_context>

<pallas_src>
import jax
import jax.numpy as jnp
from jax import lax
from jax.experimental import pallas as pl
from jax.experimental.pallas import tpu as pltpu


def _pool_fc_kernel(h_ref, m_ref, inv_ref, w_ref, b_ref, out_ref, acc_ref):
    # h_ref:   [TB, TS, H]   last_hidden_state tile (bf16 / f32)
    # m_ref:   [TB, 1, TS]   attention-mask tile (same dtype as hidden)
    # inv_ref: [TB, 1]       1 / clamp(sum(mask), 1e-9)            (f32)
    # w_ref:   [H, CP]       fc weight, transposed + lane-padded   (f32)
    # b_ref:   [1, CP]       fc bias, lane-padded                  (f32)
    # out_ref: [TB, CP]      padded logits                         (f32)
    # acc_ref: [TB, 1, H]    f32 masked-sum accumulator (resident over seq)
    s = pl.program_id(1)

    @pl.when(s == 0)
    def _():
        acc_ref[...] = jnp.zeros_like(acc_ref)

    # Masked sum over this sequence tile as a batched MXU matmul:
    #   [TB,1,TS] x [TB,TS,H] -> [TB,1,H], accumulated in f32.
    acc_ref[...] += lax.dot_general(
        m_ref[...], h_ref[...],
        dimension_numbers=(((2,), (1,)), ((0,), (0,))),
        preferred_element_type=jnp.float32)

    @pl.when(s == pl.num_programs(1) - 1)
    def _():
        pooled = acc_ref[:, 0, :]                                   # [TB, H] f32
        logits = jnp.dot(pooled, w_ref[...],
                         preferred_element_type=jnp.float32)        # [TB, CP]
        # Per-row mean scale commutes with the linear map -> apply on [TB, CP].
        out_ref[...] = logits * inv_ref[...] + b_ref[...]


def _vmem_capacity_bytes():
    try:
        return int(pltpu.get_tpu_info().vmem_capacity_bytes)
    except Exception:
        return 64 << 20   # conservative: v7x per-TensorCore VMEM


def _batch_tile_candidates(B):
    cands = [c for c in (32, 16, 8) if B % c == 0]
    if B >= 16:
        # keep >= 2 steps along the parallel batch axis (v7x megacore)
        halved = [c for c in cands if c <= B // 2]
        cands = halved or ([8] if B % 8 == 0 else [B])
    if not cands:
        cands = [B]   # small B: full-dim block is always legal
    return cands


def _seq_tile_candidates(S):
    # Lane-dense mask tiles need TS % 128 == 0 (or TS == S).
    cands = [c for c in (2048, 1024, 512, 256, 128) if S % c == 0]
    return cands or [S]


def _pick_tiles(B, S, H, CP, h_bytes, tile_budget):
    def usage(tb, ts):
        hid = 2 * tb * ts * H * h_bytes           # double-buffered hidden tile
        msk = 2 * tb * 8 * ts * h_bytes           # mask tile (sublane-padded)
        wgt = 2 * (H * CP + CP) * 4               # resident fc weight + bias
        acc = tb * 8 * H * 4                      # f32 accumulator (sublane-padded)
        out = 2 * tb * CP * 4 + 2 * tb * 4        # logits block + inv_len block
        return hid + msk + wgt + acc + out

    best = None
    for tb in _batch_tile_candidates(B):
        for ts in _seq_tile_candidates(S):
            u = usage(tb, ts)
            if u <= tile_budget and (best is None or tb * ts > best[0]):
                best = (tb * ts, tb, ts, u)
    if best is None:   # nothing fits the budget: best-effort smallest tiles
        tb = min(_batch_tile_candidates(B))
        ts = min(_seq_tile_candidates(S))
        return tb, ts, usage(tb, ts)
    return best[1], best[2], best[3]


def custom_model_head(last_hidden_state, attention_mask, fc_weight, fc_bias):
    """last_hidden_state: [B,S,H] (bf16/f32); attention_mask: [B,S]; fc_weight: [C,H]; fc_bias: [C]."""
    B, S, H = last_hidden_state.shape
    C = fc_weight.shape[0]
    CP = ((C + 127) // 128) * 128                 # lane-pad num_classes to 128

    h_dtype = last_hidden_state.dtype
    h_bytes = jnp.dtype(h_dtype).itemsize

    cap = _vmem_capacity_bytes()
    tile_budget = int(min(max(0.55 * cap, 16 << 20), 96 << 20))
    TB, TS, vmem_use = _pick_tiles(B, S, H, CP, h_bytes, tile_budget)
    vmem_limit = int(min(max(vmem_use + (16 << 20), 32 << 20), cap - (4 << 20)))

    # ---- wrapper-side glue (cheap, O(B*S) / O(H*C)) ----
    mask_f = attention_mask.astype(jnp.float32)                                   # [B, S]
    inv_len = 1.0 / jnp.maximum(jnp.sum(mask_f, axis=1, keepdims=True), 1e-9)     # [B, 1] f32
    mask3d = mask_f.astype(h_dtype)[:, None, :]                                   # [B, 1, S] lane-dense
    w_pad = jnp.zeros((H, CP), jnp.float32).at[:, :C].set(fc_weight.T.astype(jnp.float32))
    b_pad = jnp.zeros((1, CP), jnp.float32).at[:, :C].set(fc_bias.astype(jnp.float32))

    grid = (B // TB, S // TS)

    grid_spec = pltpu.PrefetchScalarGridSpec(
        num_scalar_prefetch=0,
        grid=grid,
        in_specs=[
            pl.BlockSpec((TB, TS, H), lambda b, s: (b, s, 0)),   # hidden tile
            pl.BlockSpec((TB, 1, TS), lambda b, s: (b, 0, s)),   # mask tile (lane-dense)
            pl.BlockSpec((TB, 1), lambda b, s: (b, 0)),          # inv seq-len
            pl.BlockSpec((H, CP), lambda b, s: (0, 0)),          # fc weight (resident)
            pl.BlockSpec((1, CP), lambda b, s: (0, 0)),          # fc bias (resident)
        ],
        out_specs=pl.BlockSpec((TB, CP), lambda b, s: (b, 0)),   # logits (resident over s)
        scratch_shapes=[pltpu.VMEM((TB, 1, H), jnp.float32)],    # f32 accumulator
    )

    out_padded = pl.pallas_call(
        _pool_fc_kernel,
        out_shape=jax.ShapeDtypeStruct((B, CP), jnp.float32),
        grid_spec=grid_spec,
        compiler_params=pltpu.CompilerParams(
            dimension_semantics=("parallel", "arbitrary"),
            vmem_limit_bytes=vmem_limit),
    )(last_hidden_state, mask3d, inv_len, w_pad, b_pad)

    return out_padded[:, :C]


def _reference(last_hidden_state, attention_mask, fc_weight, fc_bias):
    m = attention_mask.astype(jnp.float32)[:, :, None]
    h = last_hidden_state.astype(jnp.float32)
    sum_emb = jnp.sum(h * m, axis=1)
    sum_mask = jnp.maximum(jnp.sum(m, axis=1), 1e-9)
    mean_emb = sum_emb / sum_mask
    return mean_emb @ fc_weight.T + fc_bias


if __name__ == "__main__":
    key = jax.random.PRNGKey(0)
    B, S, H, C = 2, 16, 32, 6         # batch, seq, hidden_size, num_classes
    initializer_range = 0.02          # deterministic init mimicking _init_weights

    k1, k2 = jax.random.split(key, 2)
    # TODO(synk): the HF AutoModel backbone is not implemented; its
    # last_hidden_state output is synthesized deterministically here.
    # Backbone activations are kept in bf16 end-to-end (halves HBM traffic).
    last_hidden_state = jax.random.normal(k1, (B, S, H), dtype=jnp.float32).astype(jnp.bfloat16)
    # attention_mask: first row fully attended, second row half padded
    attention_mask = jnp.concatenate(
        [jnp.ones((1, S), jnp.int32),
         jnp.concatenate([jnp.ones((1, S // 2), jnp.int32),
                          jnp.zeros((1, S - S // 2), jnp.int32)], axis=1)],
        axis=0)
    # fc: weight ~ N(0, initializer_range), bias = 0  (as in _init_weights)
    fc_weight = initializer_range * jax.random.normal(k2, (C, H), dtype=jnp.float32)
    fc_bias = jnp.zeros((C,), jnp.float32)

    logits = custom_model_head(last_hidden_state, attention_mask, fc_weight, fc_bias)
    logits = jax.block_until_ready(logits)

    ref = _reference(last_hidden_state, attention_mask, fc_weight, fc_bias)
    assert logits.shape == (B, C)
    assert jnp.allclose(logits, ref, atol=1e-4, rtol=1e-4), (
        f"max abs err {jnp.max(jnp.abs(logits - ref))}")
    print("KERNEL_OK")
</pallas_src>

<mosaic_0001>
module attributes {stable_mosaic.version = 11 : i64} {
  func.func @_pool_fc_kernel(%arg0: i32, %arg1: i32, %arg2: memref<2x16x32xbf16, #tpu.memory_space<vmem>>, %arg3: memref<2x1x16xbf16, #tpu.memory_space<vmem>>, %arg4: memref<2x1xf32, #tpu.memory_space<vmem>>, %arg5: memref<32x128xf32, #tpu.memory_space<vmem>>, %arg6: memref<1x128xf32, #tpu.memory_space<vmem>>, %arg7: memref<2x128xf32, #tpu.memory_space<vmem>>, %arg8: memref<2x1x32xf32, #tpu.memory_space<vmem>>) attributes {dimension_semantics = [#tpu.dimension_semantics<parallel>, #tpu.dimension_semantics<arbitrary>], iteration_bounds = array<i64: 1, 1>, scalar_prefetch = 0 : i64, scratch_operands = 1 : i64, tpu.core_type = #tpu.core_type<tc>, window_params = [{transform_indices = @transform_0, window_bounds = array<i64: 2, 16, 32>}, {transform_indices = @transform_1, window_bounds = array<i64: 2, 1, 16>}, {transform_indices = @transform_2, window_bounds = array<i64: 2, 1>}, {pipeline_mode = #tpu.pipeline_mode<synchronous>, transform_indices = @transform_3, window_bounds = array<i64: 32, 128>}, {pipeline_mode = #tpu.pipeline_mode<synchronous>, transform_indices = @transform_4, window_bounds = array<i64: 1, 128>}, {transform_indices = @transform_5, window_bounds = array<i64: 2, 128>}]} {
    %c0_i32 = arith.constant 0 : i32
    %0 = arith.cmpi eq, %arg1, %c0_i32 : i32
    %1 = arith.extui %0 : i1 to i32
    %c0_i32_0 = arith.constant 0 : i32
    %2 = arith.cmpi ne, %1, %c0_i32_0 : i32
    scf.if %2 {
      %cst_14 = arith.constant 0.000000e+00 : f32
      %12 = vector.broadcast %cst_14 : f32 to vector<2x1x32xf32>
      %c0_15 = arith.constant 0 : index
      %c0_16 = arith.constant 0 : index
      %c0_17 = arith.constant 0 : index
      %13 = vector.load %arg8[%c0_15, %c0_16, %c0_17] : memref<2x1x32xf32, #tpu.memory_space<vmem>>, vector<2x1x32xf32>
      tpu.vector_store %arg8[%c0_15, %c0_16, %c0_17], %12 {strides = array<i32>} : memref<2x1x32xf32, #tpu.memory_space<vmem>>, vector<2x1x32xf32>,
    } else {
    }
    %c0 = arith.constant 0 : index
    %c0_1 = arith.constant 0 : index
    %c0_2 = arith.constant 0 : index
    %3 = vector.load %arg8[%c0, %c0_1, %c0_2] : memref<2x1x32xf32, #tpu.memory_space<vmem>>, vector<2x1x32xf32>
    %c0_3 = arith.constant 0 : index
    %c0_4 = arith.constant 0 : index
    %c0_5 = arith.constant 0 : index
    %4 = vector.load %arg3[%c0_3, %c0_4, %c0_5] : memref<2x1x16xbf16, #tpu.memory_space<vmem>>, vector<2x1x16xbf16>
    %c0_6 = arith.constant 0 : index
    %c0_7 = arith.constant 0 : index
    %c0_8 = arith.constant 0 : index
    %5 = vector.load %arg2[%c0_6, %c0_7, %c0_8] : memref<2x16x32xbf16, #tpu.memory_space<vmem>>, vector<2x16x32xbf16>
    %cst = arith.constant dense<0.000000e+00> : vector<2x1x32xf32>
    %6 = tpu.matmul %4, %5, %cst {dimension_numbers = #tpu.dot_dimension_numbers<[2], [1], [1], [2], [0, 0, 0, 1, 1, 2], [0], [0]>} : vector<2x1x16xbf16>, vector<2x16x32xbf16>, vector<2x1x32xf32> -> vector<2x1x32xf32>
    %7 = arith.addf %3, %6 : vector<2x1x32xf32>
    %c0_9 = arith.constant 0 : index
    %c0_10 = arith.constant 0 : index
    %c0_11 = arith.constant 0 : index
    %8 = vector.load %arg8[%c0_9, %c0_10, %c0_11] : memref<2x1x32xf32, #tpu.memory_space<vmem>>, vector<2x1x32xf32>
    tpu.vector_store %arg8[%c0_9, %c0_10, %c0_11], %7 {strides = array<i32>} : memref<2x1x32xf32, #tpu.memory_space<vmem>>, vector<2x1x32xf32>,
    %c0_i32_12 = arith.constant 0 : i32
    %9 = arith.cmpi eq, %arg1, %c0_i32_12 : i32
    %10 = arith.extui %9 : i1 to i32
    %c0_i32_13 = arith.constant 0 : i32
    %11 = arith.cmpi ne, %10, %c0_i32_13 : i32
    scf.if %11 {
      %c0_14 = arith.constant 0 : index
      %c0_15 = arith.constant 0 : index
      %c0_16 = arith.constant 0 : index
      %12 = vector.load %arg8[%c0_14, %c0_15, %c0_16] : memref<2x1x32xf32, #tpu.memory_space<vmem>>, vector<2x1x32xf32>
      %13 = vector.shape_cast %12 : vector<2x1x32xf32> to vector<2x32xf32>
      %c0_17 = arith.constant 0 : index
      %c0_18 = arith.constant 0 : index
      %14 = vector.load %arg5[%c0_17, %c0_18] : memref<32x128xf32, #tpu.memory_space<vmem>>, vector<32x128xf32>
      %cst_19 = arith.constant dense<0.000000e+00> : vector<2x128xf32>
      %15 = tpu.matmul %13, %14, %cst_19 {dimension_numbers = #tpu.dot_dimension_numbers<[1], [0], [0], [1], [0, 0, 1, 1], [], []>} : vector<2x32xf32>, vector<32x128xf32>, vector<2x128xf32> -> vector<2x128xf32>
      %c0_20 = arith.constant 0 : index
      %c0_21 = arith.constant 0 : index
      %16 = vector.load %arg4[%c0_20, %c0_21] : memref<2x1xf32, #tpu.memory_space<vmem>>, vector<2x1xf32>
      %17 = vector.broadcast %16 : vector<2x1xf32> to vector<2x128xf32>
      %18 = arith.mulf %15, %17 : vector<2x128xf32>
      %c0_22 = arith.constant 0 : index
      %c0_23 = arith.constant 0 : index
      %19 = vector.load %arg6[%c0_22, %c0_23] : memref<1x128xf32, #tpu.memory_space<vmem>>, vector<1x128xf32>
      %20 = vector.broadcast %19 : vector<1x128xf32> to vector<2x128xf32>
      %21 = arith.addf %18, %20 : vector<2x128xf32>
      %c0_24 = arith.constant 0 : index
      %c0_25 = arith.constant 0 : index
      %22 = vector.load %arg7[%c0_24, %c0_25] : memref<2x128xf32, #tpu.memory_space<vmem>>, vector<2x128xf32>
      tpu.vector_store %arg7[%c0_24, %c0_25], %21 {strides = array<i32>} : memref<2x128xf32, #tpu.memory_space<vmem>>, vector<2x128xf32>,
    } else {
    }
    return
  }
  func.func @transform_0(%arg0: i32, %arg1: i32) -> (i32, i32, i32) {
    %c0_i32 = arith.constant 0 : i32
    %c0_i32_0 = arith.constant 0 : i32
    return %arg0, %arg1, %c0_i32 : i32, i32, i32
  }
  func.func @transform_1(%arg0: i32, %arg1: i32) -> (i32, i32, i32) {
    %c0_i32 = arith.constant 0 : i32
    %c0_i32_0 = arith.constant 0 : i32
    return %arg0, %c0_i32, %arg1 : i32, i32, i32
  }
  func.func @transform_2(%arg0: i32, %arg1: i32) -> (i32, i32) {
    %c0_i32 = arith.constant 0 : i32
    %c0_i32_0 = arith.constant 0 : i32
    return %arg0, %c0_i32 : i32, i32
  }
  func.func @transform_3(%arg0: i32, %arg1: i32) -> (i32, i32) {
    %c0_i32 = arith.constant 0 : i32
    %c0_i32_0 = arith.constant 0 : i32
    %c0_i32_1 = arith.constant 0 : i32
    return %c0_i32, %c0_i32_0 : i32, i32
  }
  func.func @transform_4(%arg0: i32, %arg1: i32) -> (i32, i32) {
    %c0_i32 = arith.constant 0 : i32
    %c0_i32_0 = arith.constant 0 : i32
    %c0_i32_1 = arith.constant 0 : i32
    return %c0_i32, %c0_i32_0 : i32, i32
  }
  func.func @transform_5(%arg0: i32, %arg1: i32) -> (i32, i32) {
    %c0_i32 = arith.constant 0 : i32
    %c0_i32_0 = arith.constant 0 : i32
    return %arg0, %c0_i32 : i32, i32
  }
}

</mosaic_0001>

<llo_original>
// kernel: tpu_custom_call.1
$region0: #{tpu_custom_call.1}
  #allocation0 [shape = 'u32[]', space=smem, size = 0x4, offset = 0x4, fixed_abs, tag = 'smem constant byte address 0x4 - core index']
  #allocation1 [shape = 'u32[72,128]{1,0:T(1,128)}', space=vmem, size = 0x9000, scoped, tag = 'internal scratch']
  #allocation2 [shape = 'f32[2,1,32]{2,1,0:T(1,128)}', space=vmem, size = 0x400, scoped, tag = 'scratch operand']
  %s0 = inlined_call_operand.hbm [shape: bf16[2,16,32], index: 0, kind: input, shape index: {}]
  %s1 = inlined_call_operand.vmem [shape: bf16[2,1,16], index: 1, kind: input, shape index: {}]
  %s2 = inlined_call_operand.vmem [shape: f32[2,1], index: 2, kind: input, shape index: {}]
  %s3 = inlined_call_operand.hbm [shape: f32[32,128], index: 3, kind: input, shape index: {}]
  %s4 = inlined_call_operand.vmem [shape: f32[1,128], index: 4, kind: input, shape index: {}]
  %s5 = inlined_call_operand.hbm [shape: f32[2,128], index: 5, kind: output, shape index: {}]
  %s6 = sld [smem:[#allocation0]]
  $region46: #{tpu_custom_call.1} parent=0
    _
  %s8 = ssub.s32 1, %s6
  %s9 = scalar_select 0, %s8, %s6
  $region1: #{tpu_custom_call.1} parent=0
    #allocation3 [shape = 'u8[8192]{0}', space=vmem, size = 0x2000, scoped, tag = 'input window, operand 0, single buffered']
    #allocation4 [shape = 's32[1]{0}', space=sflag, size = 0x4, scoped, tag = 'scoped memory for tpu_custom_call.1']
    #allocation5 [shape = 's32[1]{0}', space=sflag, size = 0x4, scoped, tag = 'scoped memory for tpu_custom_call.1']
    #allocation6 [shape = 'u8[16384]{0}', space=vmem, size = 0x4000, scoped, tag = 'input window, operand 3, single buffered']
    #allocation7 [shape = 's32[1]{0}', space=sflag, size = 0x4, scoped, tag = 'scoped memory for tpu_custom_call.1']
    #allocation8 [shape = 'u8[1024]{0}', space=vmem, size = 0x400, scoped, tag = 'output window, operand 0, single buffered']
    %10 = vsyncpa [#allocation4], 0
    %11 = vsyncpa [#allocation7], 0
    %12 = vsyncpa [#allocation5], 0
    // Predicated region
    $region2: #{tpu_custom_call.1} parent=1 // pred_check
      _
    $region3: #{tpu_custom_call.1} parent=1 // pred_check_branch
      %14 = sbr.rel (0) target = $region5
    $region4: #{tpu_custom_call.1} parent=1 // pred_region
      %16 = vsyncadd [#allocation4], 0
      %s17 = sshll.u32 %s0, 4
      %s18 = int_to_ptr.hbm [resolvable:$true] %s17
      %s19 = sshll.u32 [#allocation3], 4
      %s20 = int_to_ptr.vmem [resolvable:$true] %s19
      %25 = dma.hbm_to_vmem [thread:$0]  %s18, 256, %s20, [#allocation4], 64, 64, 4
    $region5: #{tpu_custom_call.1} parent=1 // pred_fallthru
      _
    // Predicated region
    $region6: #{tpu_custom_call.1} parent=1 // pred_check
      _
    $region7: #{tpu_custom_call.1} parent=1 // pred_check_branch
      %27 = sbr.rel (0) target = $region9
    $region8: #{tpu_custom_call.1} parent=1 // pred_region
      _
    $region9: #{tpu_custom_call.1} parent=1 // pred_fallthru
      _
    // Predicated region
    $region10: #{tpu_custom_call.1} parent=1 // pred_check
      _
    $region11: #{tpu_custom_call.1} parent=1 // pred_check_branch
      %29 = sbr.rel (0) target = $region13
    $region12: #{tpu_custom_call.1} parent=1 // pred_region
      _
    $region13: #{tpu_custom_call.1} parent=1 // pred_fallthru
      _
    // Predicated region
    $region14: #{tpu_custom_call.1} parent=1 // pred_check
      _
    $region15: #{tpu_custom_call.1} parent=1 // pred_check_branch
      %31 = sbr.rel (0) target = $region17
    $region16: #{tpu_custom_call.1} parent=1 // pred_region
      %33 = vsyncadd [#allocation7], 0
      %s34 = sshll.u32 %s3, 4
      %s35 = int_to_ptr.hbm [resolvable:$true] %s34
      %s36 = sshll.u32 [#allocation6], 4
      %s37 = int_to_ptr.vmem [resolvable:$true] %s36
      %42 = dma.hbm_to_vmem [thread:$0]  %s35, 512, %s37, [#allocation7], 128, 128, 8
    $region17: #{tpu_custom_call.1} parent=1 // pred_fallthru
      _
    // Predicated region
    $region18: #{tpu_custom_call.1} parent=1 // pred_check
      _
    $region19: #{tpu_custom_call.1} parent=1 // pred_check_branch
      %44 = sbr.rel (0) target = $region21
    $region20: #{tpu_custom_call.1} parent=1 // pred_region
      _
    $region21: #{tpu_custom_call.1} parent=1 // pred_fallthru
      _
    // Predicated region
    $region22: #{tpu_custom_call.1} parent=1 // pred_check
      _
    $region23: #{tpu_custom_call.1} parent=1 // pred_check_branch
      %46 = sbr.rel (0) target = $region25
    $region24: #{tpu_custom_call.1} parent=1 // pred_region
      %48 = dma.done [#allocation4], 256
    $region25: #{tpu_custom_call.1} parent=1 // pred_fallthru
      _
    // Predicated region
    $region26: #{tpu_custom_call.1} parent=1 // pred_check
      _
    $region27: #{tpu_custom_call.1} parent=1 // pred_check_branch
      %50 = sbr.rel (0) target = $region29
    $region28: #{tpu_custom_call.1} parent=1 // pred_region
      %52 = dma.done [#allocation7], 512
    $region29: #{tpu_custom_call.1} parent=1 // pred_fallthru
      _
    %p54 = scmp.eq.s32.totalorder 0, 0
    // Predicated region
    $region30: #{tpu_custom_call.1} parent=1 // pred_check
      %p55 = pneg %p54
    $region31: #{tpu_custom_call.1} parent=1 // pred_check_branch
      %57 = sbr.rel (%p55) target = $region33
    $region32: #{tpu_custom_call.1} parent=1 // pred_region
      %vm58 = vcmask 253952
      %59 = vst.msk [vmem:[#allocation2] sm:$0x1] %vm58, 0.0
      %60 = vst.msk [vmem:[#allocation2 + $0x1] sm:$0x1] %vm58, 0.0
    $region33: #{tpu_custom_call.1} parent=1 // pred_fallthru
      _
    %v61 = vld [vmem:[#allocation2] sm:$0x1]
    %v62 = vld [vmem:[#allocation2 + $0x1] sm:$0x1]
    %v63 = vld [vmem:[%s1] sm:$0x1]
    %v64 = vld [vmem:[%s1 + $0x1] sm:$0x1]
    %v65 = vld [vmem:[#allocation3] sm:$0xf]
    %v66 = vld [vmem:[#allocation3 + $0x4] sm:$0xf]
    %v67 = vld [vmem:[#allocation3 + $0x8] sm:$0xf]
    %v68 = vld [vmem:[#allocation3 + $0xc] sm:$0xf]
    %v71 = vunpack.c.l.b16 %v65
    %v72 = vunpack.c.l.b16 %v66
    %v73 = vpack.c.b16 %v72, %v71
    %vm75 = vcmask 130048
    %v77 = vsel %vm75, %v63, 0
    %79 = vmatpush.bf16.msra.mxu0 0
    %80 = vmatpush.bf16.msra.mxu0 0
    %81 = vmatpush.bf16.msra.mxu0 0
    %82 = vmatpush.bf16.msra.mxu0 0
    %83 = vmatpush.bf16.msra.mxu0 0
    %84 = vmatpush.bf16.msra.mxu0 0
    %85 = vmatpush.bf16.msra.mxu0 0
    %86 = vmatpush.bf16.msra.mxu0 %v73
    %87 = vmatmul.bf16.gmra.mxu0 %v77
    %v88 = vpop.f32.mrf.mxu0
    %v89 = vadd.f32 0.0, %v88
    %v90 = vpop.f32.mrf.mxu0
    %91 = vdwg.mxu0
    %v94 = vunpack.c.l.b16 %v67
    %v95 = vunpack.c.l.b16 %v68
    %v96 = vpack.c.b16 %v95, %v94
    %v99 = vsel %vm75, %v64, 0
    %101 = vmatpush.bf16.msra.mxu0 0
    %102 = vmatpush.bf16.msra.mxu0 0
    %103 = vmatpush.bf16.msra.mxu0 0
    %104 = vmatpush.bf16.msra.mxu0 0
    %105 = vmatpush.bf16.msra.mxu0 0
    %106 = vmatpush.bf16.msra.mxu0 0
    %107 = vmatpush.bf16.msra.mxu0 0
    %108 = vmatpush.bf16.msra.mxu0 %v96
    %109 = vmatmul.bf16.gmra.mxu0 %v99
    %v110 = vpop.f32.mrf.mxu0
    %v111 = vadd.f32 0.0, %v110
    %v112 = vpop.f32.mrf.mxu0
    %113 = vdwg.mxu0
    %v114 = vadd.f32 %v61, %v89
    %v115 = vadd.f32 %v62, %v111
    %vm116 = vcmask 253952
    %117 = vst.msk [vmem:[#allocation2] sm:$0x1] %vm116, %v114
    %118 = vst.msk [vmem:[#allocation2 + $0x1] sm:$0x1] %vm116, %v115
    // Predicated region
    $region34: #{tpu_custom_call.1} parent=1 // pred_check
      %p119 = pneg %p54
    $region35: #{tpu_custom_call.1} parent=1 // pred_check_branch
      %121 = sbr.rel (%p119) target = $region37
    $region36: #{tpu_custom_call.1} parent=1 // pred_region
      %v122 = vld [vmem:[#allocation2] sm:$0x1]
      %v123 = vld [vmem:[#allocation2 + $0x1] sm:$0x1]
      %v124 = vld [vmem:[#allocation6] sm:$0xff]
      %v125 = vld [vmem:[#allocation6 + $0x8] sm:$0xff]
      %v126 = vld [vmem:[#allocation6 + $0x10] sm:$0xff]
      %v127 = vld [vmem:[#allocation6 + $0x18] sm:$0xff]
      %130 = vst [vmem:[#allocation1] ss:$9 sm:$0xff] %v122
      %s131 = scalar_lea.vmem [#allocation1], 1
      %132 = vst [vmem:[%s131] ss:$9 sm:$0xff] %v123
      %v133 = vld [vmem:[#allocation1] sm:$0xff]
      %vm134 = vcmask 261120
      %v135 = vsel %vm134, %v133, 0
      %137 = vmatpush.msra.mxu0 0.0
      %138 = vmatpush.msra.mxu0 0.0
      %139 = vmatpush.msra.mxu0 0.0
      %140 = vmatpush.msra.mxu0 0.0
      %141 = vmatpush.msra.mxu0 0.0
      %142 = vmatpush.msra.mxu0 0.0
      %143 = vmatpush.msra.mxu0 0.0
      %144 = vmatpush.msra.mxu0 0.0
      %145 = vmatpush.msra.mxu0 0.0
      %146 = vmatpush.msra.mxu0 0.0
      %147 = vmatpush.msra.mxu0 0.0
      %148 = vmatpush.msra.mxu0 0.0
      %149 = vmatpush.msra.mxu0 %v127
      %150 = vmatpush.msra.mxu0 %v126
      %151 = vmatpush.msra.mxu0 %v125
      %152 = vmatpush.msra.mxu0 %v124
      %153 = vmatmul.f32.gmra.mxu0 %v135
      %v154 = vpop.f32.mrf.mxu0
      %v155 = vadd.f32 0.0, %v154
      %156 = vdwg.mxu0
      %v157 = vld [vmem:[%s2] sm:$0x3]
      %159 = vset.pattern.permute.xlu0 0
      %160 = vperm.xlu0 %159, %v157
      %v161 = vpop.permute.xlu0 %160
      %v163 = vmul.f32 %v155, %v161
      %v164 = vld [vmem:[%s4] sm:$0x1]
      %v166 = vperm.slane %v164, 0
      %v168 = vadd.f32 %v163, %v166
      %169 = vst [vmem:[#allocation8] sm:$0x3] %v168
    $region37: #{tpu_custom_call.1} parent=1 // pred_fallthru
      _
    // Predicated region
    $region38: #{tpu_custom_call.1} parent=1 // pred_check
      _
    $region39: #{tpu_custom_call.1} parent=1 // pred_check_branch
      %171 = sbr.rel (0) target = $region41
    $region40: #{tpu_custom_call.1} parent=1 // pred_region
      %173 = vsyncadd [#allocation5], 0
      %s175 = sshll.u32 [#allocation8], 4
      %s176 = int_to_ptr.vmem [resolvable:$true] %s175
      %s177 = sshll.u32 %s5, 4
      %s178 = int_to_ptr.hbm [resolvable:$true] %s177
      %180 = dma.vmem_to_hbm [thread:$0]  %s176, 32, %s178, [#allocation5]
    $region41: #{tpu_custom_call.1} parent=1 // pred_fallthru
      _
    // Predicated region
    $region42: #{tpu_custom_call.1} parent=1 // pred_check
      _
    $region43: #{tpu_custom_call.1} parent=1 // pred_check_branch
      %182 = sbr.rel (0) target = $region45
    $region44: #{tpu_custom_call.1} parent=1 // pred_region
      %184 = dma.done [#allocation5], 32
    $region45: #{tpu_custom_call.1} parent=1 // pred_fallthru
      _
    %185 = vsyncpa [#allocation4], 1
    %186 = vsyncpa [#allocation7], 1
    %187 = vsyncpa [#allocation5], 1

</llo_original>
